<compile_context>
chip_gen: v7x
topology: tpu7x:2x2x1
jax: 0.10.0
libtpu: 0.0.40
codegen_flags: <defaults>
</compile_context>

<pallas_src>
import jax
import jax.numpy as jnp
from jax.experimental import pallas as pl
from jax.experimental.pallas import tpu as pltpu

_VMEM_BUDGET = 12 * 1024 * 1024      # double-buffered per-step budget, safe on v5e/v6e/v7x
_SPLIT_FLOPS_THRESHOLD = 4_000_000   # only split the batch axis when per-step work >= this


def _epilogue(bmm_f32, inp_tile, out_dtype):
    # 1.5*(bmm + inp) + 1.4*bmm == 2.9*bmm + 1.5*inp (exact algebra; fp rounding differs
    # from the torch two-step formulation by amounts well inside the 1e-4 tolerance).
    return (2.9 * bmm_f32 + 1.5 * inp_tile.astype(jnp.float32)).astype(out_dtype)


def _kernel_batched(inp_ref, b1_ref, b2_ref, out_ref):
    # refs: (Bt, M, N), (Bt, M, K), (Bt, K, N), (Bt, M, N)
    bmm = jnp.einsum(
        "bmk,bkn->bmn", b1_ref[...], b2_ref[...], preferred_element_type=jnp.float32
    )
    out_ref[...] = _epilogue(bmm, inp_ref[...], out_ref.dtype)


def _kernel_squeezed(inp_ref, b1_ref, b2_ref, out_ref):
    # batch dim squeezed -> plain 2-D matmul, clean single MXU vmatmul chain.
    bmm = jnp.dot(b1_ref[...], b2_ref[...], preferred_element_type=jnp.float32)
    out_ref[...] = _epilogue(bmm, inp_ref[...], out_ref.dtype)


def _kernel_mnk(inp_ref, b1_ref, b2_ref, out_ref, acc_ref):
    # Production-size path: refs are 2-D tiles (batch squeezed), K is a grid reduction
    # axis accumulated in an f32 VMEM scratch.
    @pl.when(pl.program_id(3) == 0)
    def _():
        acc_ref[...] = jnp.zeros_like(acc_ref)

    acc_ref[...] += jnp.dot(b1_ref[...], b2_ref[...], preferred_element_type=jnp.float32)

    @pl.when(pl.program_id(3) == pl.num_programs(3) - 1)
    def _():
        out_ref[...] = _epilogue(acc_ref[...], inp_ref[...], out_ref.dtype)


def _pick_batch_tile(B, M, K, N, itemsize):
    # Double-buffered per-step footprint for one batch (2 x (in + out tiles)).
    per_batch_bytes = 2 * (M * K + K * N + 2 * M * N) * itemsize
    max_by_vmem = max(1, _VMEM_BUDGET // max(1, per_batch_bytes))
    # Only give (potentially) two TensorCores separate grid steps when each step
    # carries enough MXU work to dominate the fixed per-step / DMA overhead.
    flops_per_batch = 2 * M * K * N
    if B >= 2 and (B // 2) * flops_per_batch >= _SPLIT_FLOPS_THRESHOLD:
        max_by_work = max(1, B // 2)
    else:
        max_by_work = B
    tile = int(min(B, max_by_vmem, max_by_work))
    while B % tile != 0:
        tile -= 1
    return tile


def baddbmm_model(inp, batch1, batch2, *, batch_tile=None):
    B, M, K = batch1.shape
    Bv, Kv, N = batch2.shape
    assert (Bv, Kv) == (B, K)
    assert inp.shape == (B, M, N)
    itemsize = jnp.dtype(inp.dtype).itemsize

    cost = pl.CostEstimate(
        flops=2 * B * M * K * N,
        transcendentals=0,
        bytes_accessed=itemsize * (B * M * K + B * K * N + 2 * B * M * N),
    )

    per_batch_bytes = 2 * (M * K + K * N + 2 * M * N) * itemsize
    mnk_divisible = (M % 128 == 0) and (N % 128 == 0) and (K % 128 == 0)

    if batch_tile is None and per_batch_bytes > _VMEM_BUDGET and mnk_divisible:
        # Production-size path: tile M/N (multiples of 128, lane-dense N) and reduce
        # over a trailing K grid axis into an f32 VMEM accumulator.
        tm = 256 if M % 256 == 0 else 128
        tn = 256 if N % 256 == 0 else 128
        tk = 512 if K % 512 == 0 else (256 if K % 256 == 0 else 128)
        return pl.pallas_call(
            _kernel_mnk,
            out_shape=jax.ShapeDtypeStruct((B, M, N), inp.dtype),
            grid_spec=pltpu.PrefetchScalarGridSpec(
                num_scalar_prefetch=0,
                grid=(B, M // tm, N // tn, K // tk),
                in_specs=[
                    pl.BlockSpec((None, tm, tn), lambda b, i, j, k: (b, i, j)),  # input
                    pl.BlockSpec((None, tm, tk), lambda b, i, j, k: (b, i, k)),  # batch1
                    pl.BlockSpec((None, tk, tn), lambda b, i, j, k: (b, k, j)),  # batch2
                ],
                out_specs=pl.BlockSpec((None, tm, tn), lambda b, i, j, k: (b, i, j)),
                scratch_shapes=[pltpu.VMEM((tm, tn), jnp.float32)],
            ),
            compiler_params=pltpu.CompilerParams(
                dimension_semantics=("parallel", "parallel", "parallel", "arbitrary"),
                vmem_limit_bytes=32 * 1024 * 1024,
            ),
            cost_estimate=cost,
        )(inp, batch1, batch2)

    # TODO(synk): a single batch whose working set exceeds VMEM with non-128-divisible
    # M/N/K would need edge-tile masking; not implemented (toy sizes fit comfortably).

    if batch_tile is None:
        batch_tile = _pick_batch_tile(B, M, K, N, itemsize)
    assert B % batch_tile == 0
    num_steps = B // batch_tile

    if batch_tile == 1:
        kernel = _kernel_squeezed
        lead = None          # squeeze the size-1 batch dim -> 2-D refs in the kernel
    else:
        kernel = _kernel_batched
        lead = batch_tile

    return pl.pallas_call(
        kernel,
        out_shape=jax.ShapeDtypeStruct((B, M, N), inp.dtype),
        grid_spec=pltpu.PrefetchScalarGridSpec(
            num_scalar_prefetch=0,
            grid=(num_steps,),
            in_specs=[
                pl.BlockSpec((lead, M, N), lambda b: (b, 0, 0)),  # input
                pl.BlockSpec((lead, M, K), lambda b: (b, 0, 0)),  # batch1
                pl.BlockSpec((lead, K, N), lambda b: (b, 0, 0)),  # batch2
            ],
            out_specs=pl.BlockSpec((lead, M, N), lambda b: (b, 0, 0)),
        ),
        compiler_params=pltpu.CompilerParams(
            dimension_semantics=("parallel",),
            vmem_limit_bytes=32 * 1024 * 1024,
        ),
        cost_estimate=cost,
    )(inp, batch1, batch2)


if __name__ == "__main__":
    B, M, K, N = 2, 8, 32, 128
    key = jax.random.PRNGKey(0)
    k1, k2, k3 = jax.random.split(key, 3)
    inp = jax.random.normal(k1, (B, M, N), dtype=jnp.float32)
    batch1 = jax.random.normal(k2, (B, M, K), dtype=jnp.float32)
    batch2 = jax.random.normal(k3, (B, K, N), dtype=jnp.float32)

    out = baddbmm_model(inp, batch1, batch2)
    jax.block_until_ready(out)

    # Reference (plain JAX), matching the torch module:
    #   bmm = b1 @ b2 ; add = bmm + inp ; out = 1.5*add + 1.4*bmm
    bmm = jnp.einsum("bmk,bkn->bmn", batch1, batch2)
    ref = 1.5 * (bmm + inp) + 1.4 * bmm
    assert jnp.allclose(out, ref, atol=1e-4, rtol=1e-4), "mismatch vs reference"
    print("KERNEL_OK")
</pallas_src>

<mosaic_0001>
module attributes {stable_mosaic.version = 11 : i64} {
  func.func @_kernel_batched(%arg0: i32, %arg1: memref<2x8x128xf32, #tpu.memory_space<vmem>>, %arg2: memref<2x8x32xf32, #tpu.memory_space<vmem>>, %arg3: memref<2x32x128xf32, #tpu.memory_space<vmem>>, %arg4: memref<2x8x128xf32, #tpu.memory_space<vmem>>) attributes {dimension_semantics = [#tpu.dimension_semantics<parallel>], iteration_bounds = array<i64: 1>, scalar_prefetch = 0 : i64, scratch_operands = 0 : i64, tpu.core_type = #tpu.core_type<tc>, window_params = [{transform_indices = @transform_0, window_bounds = array<i64: 2, 8, 128>}, {transform_indices = @transform_1, window_bounds = array<i64: 2, 8, 32>}, {transform_indices = @transform_2, window_bounds = array<i64: 2, 32, 128>}, {transform_indices = @transform_3, window_bounds = array<i64: 2, 8, 128>}]} {
    %c0 = arith.constant 0 : index
    %c0_0 = arith.constant 0 : index
    %c0_1 = arith.constant 0 : index
    %0 = vector.load %arg2[%c0, %c0_0, %c0_1] : memref<2x8x32xf32, #tpu.memory_space<vmem>>, vector<2x8x32xf32>
    %c0_2 = arith.constant 0 : index
    %c0_3 = arith.constant 0 : index
    %c0_4 = arith.constant 0 : index
    %1 = vector.load %arg3[%c0_2, %c0_3, %c0_4] : memref<2x32x128xf32, #tpu.memory_space<vmem>>, vector<2x32x128xf32>
    "tpu.trace_start"() <{level = 10 : i32, message = "bmk,bkn->bmn"}> : () -> ()
    %cst = arith.constant dense<0.000000e+00> : vector<2x8x128xf32>
    %2 = tpu.matmul %0, %1, %cst {dimension_numbers = #tpu.dot_dimension_numbers<[2], [1], [1], [2], [0, 0, 0, 1, 1, 2], [0], [0]>} : vector<2x8x32xf32>, vector<2x32x128xf32>, vector<2x8x128xf32> -> vector<2x8x128xf32>
    "tpu.trace_stop"() : () -> ()
    %c0_5 = arith.constant 0 : index
    %c0_6 = arith.constant 0 : index
    %c0_7 = arith.constant 0 : index
    %3 = vector.load %arg1[%c0_5, %c0_6, %c0_7] : memref<2x8x128xf32, #tpu.memory_space<vmem>>, vector<2x8x128xf32>
    %cst_8 = arith.constant 2.900000e+00 : f32
    %4 = vector.broadcast %cst_8 : f32 to vector<2x8x128xf32>
    %5 = arith.mulf %4, %2 : vector<2x8x128xf32>
    %cst_9 = arith.constant 1.500000e+00 : f32
    %6 = vector.broadcast %cst_9 : f32 to vector<2x8x128xf32>
    %7 = arith.mulf %6, %3 : vector<2x8x128xf32>
    %8 = arith.addf %5, %7 : vector<2x8x128xf32>
    %c0_10 = arith.constant 0 : index
    %c0_11 = arith.constant 0 : index
    %c0_12 = arith.constant 0 : index
    %9 = vector.load %arg4[%c0_10, %c0_11, %c0_12] : memref<2x8x128xf32, #tpu.memory_space<vmem>>, vector<2x8x128xf32>
    tpu.vector_store %arg4[%c0_10, %c0_11, %c0_12], %8 {strides = array<i32>} : memref<2x8x128xf32, #tpu.memory_space<vmem>>, vector<2x8x128xf32>,
    return
  }
  func.func @transform_0(%arg0: i32) -> (i32, i32, i32) {
    %c0_i32 = arith.constant 0 : i32
    %c0_i32_0 = arith.constant 0 : i32
    %c0_i32_1 = arith.constant 0 : i32
    return %arg0, %c0_i32, %c0_i32_0 : i32, i32, i32
  }
  func.func @transform_1(%arg0: i32) -> (i32, i32, i32) {
    %c0_i32 = arith.constant 0 : i32
    %c0_i32_0 = arith.constant 0 : i32
    %c0_i32_1 = arith.constant 0 : i32
    return %arg0, %c0_i32, %c0_i32_0 : i32, i32, i32
  }
  func.func @transform_2(%arg0: i32) -> (i32, i32, i32) {
    %c0_i32 = arith.constant 0 : i32
    %c0_i32_0 = arith.constant 0 : i32
    %c0_i32_1 = arith.constant 0 : i32
    return %arg0, %c0_i32, %c0_i32_0 : i32, i32, i32
  }
  func.func @transform_3(%arg0: i32) -> (i32, i32, i32) {
    %c0_i32 = arith.constant 0 : i32
    %c0_i32_0 = arith.constant 0 : i32
    %c0_i32_1 = arith.constant 0 : i32
    return %arg0, %c0_i32, %c0_i32_0 : i32, i32, i32
  }
}

</mosaic_0001>

<llo_original>
// kernel: tpu_custom_call.1
$region0: #{tpu_custom_call.1}
  #allocation0 [shape = 'u32[]', space=smem, size = 0x4, offset = 0x4, fixed_abs, tag = 'smem constant byte address 0x4 - core index']
  #allocation1 [shape = 'u32[144,128]{1,0:T(1,128)}', space=vmem, size = 0x12000, scoped, tag = 'internal scratch']
  %s0 = inlined_call_operand.hbm [shape: f32[2,8,128], index: 0, kind: input, shape index: {}]
  %s1 = inlined_call_operand.hbm [shape: f32[2,8,32], index: 1, kind: input, shape index: {}]
  %s2 = inlined_call_operand.hbm [shape: f32[2,32,128], index: 2, kind: input, shape index: {}]
  %s3 = inlined_call_operand.hbm [shape: f32[2,8,128], index: 3, kind: output, shape index: {}]
  %s4 = sld [smem:[#allocation0]]
  $region34: #{tpu_custom_call.1} parent=0
    _
  %s6 = ssub.s32 1, %s4
  %s7 = scalar_select 0, %s6, %s4
  $region1: #{tpu_custom_call.1} parent=0
    #allocation2 [shape = 'u8[8192]{0}', space=vmem, size = 0x2000, scoped, tag = 'input window, operand 0, single buffered']
    #allocation3 [shape = 's32[1]{0}', space=sflag, size = 0x4, scoped, tag = 'scoped memory for tpu_custom_call.1']
    #allocation4 [shape = 's32[1]{0}', space=sflag, size = 0x4, scoped, tag = 'scoped memory for tpu_custom_call.1']
    #allocation5 [shape = 'u8[8192]{0}', space=vmem, size = 0x2000, scoped, tag = 'input window, operand 1, single buffered']
    #allocation6 [shape = 's32[1]{0}', space=sflag, size = 0x4, scoped, tag = 'scoped memory for tpu_custom_call.1']
    #allocation7 [shape = 'u8[32768]{0}', space=vmem, size = 0x8000, scoped, tag = 'input window, operand 2, single buffered']
    #allocation8 [shape = 'u8[8192]{0}', space=vmem, size = 0x2000, scoped, tag = 'output window, operand 0, single buffered']
    %8 = vsyncpa [#allocation3], 0
    %9 = vsyncpa [#allocation6], 0
    %10 = vsyncpa [#allocation4], 0
    // Predicated region
    $region2: #{tpu_custom_call.1} parent=1 // pred_check
      _
    $region3: #{tpu_custom_call.1} parent=1 // pred_check_branch
      %12 = sbr.rel (0) target = $region5
    $region4: #{tpu_custom_call.1} parent=1 // pred_region
      %s14 = ssub.s32 256, 256
      %15 = vsyncadd [#allocation3], %s14
      %s16 = sshll.u32 [#allocation2], 4
      %s17 = int_to_ptr.vmem [resolvable:$true] %s16
      %22 = dma.hbm_to_vmem [thread:$0]  %s0, 256, %s17, [#allocation3], 128, 128, 8
    $region5: #{tpu_custom_call.1} parent=1 // pred_fallthru
      _
    // Predicated region
    $region6: #{tpu_custom_call.1} parent=1 // pred_check
      _
    $region7: #{tpu_custom_call.1} parent=1 // pred_check_branch
      %24 = sbr.rel (0) target = $region9
    $region8: #{tpu_custom_call.1} parent=1 // pred_region
      %s26 = ssub.s32 256, 256
      %27 = vsyncadd [#allocation6], %s26
      %s28 = sshll.u32 [#allocation5], 4
      %s29 = int_to_ptr.vmem [resolvable:$true] %s28
      %34 = dma.hbm_to_vmem [thread:$0]  %s1, 256, %s29, [#allocation6], 128, 128, 8
    $region9: #{tpu_custom_call.1} parent=1 // pred_fallthru
      _
    // Predicated region
    $region10: #{tpu_custom_call.1} parent=1 // pred_check
      _
    $region11: #{tpu_custom_call.1} parent=1 // pred_check_branch
      %36 = sbr.rel (0) target = $region13
    $region12: #{tpu_custom_call.1} parent=1 // pred_region
      %s38 = ssub.s32 1024, 1024
      %39 = vsyncadd [#allocation6], %s38
      %s40 = sshll.u32 [#allocation7], 4
      %s41 = int_to_ptr.vmem [resolvable:$true] %s40
      %46 = dma.hbm_to_vmem [thread:$0]  %s2, 1024, %s41, [#allocation6], 128, 128, 8
    $region13: #{tpu_custom_call.1} parent=1 // pred_fallthru
      _
    // Predicated region
    $region14: #{tpu_custom_call.1} parent=1 // pred_check
      _
    $region15: #{tpu_custom_call.1} parent=1 // pred_check_branch
      %48 = sbr.rel (0) target = $region17
    $region16: #{tpu_custom_call.1} parent=1 // pred_region
      %49 = dma.done [#allocation3], 256
    $region17: #{tpu_custom_call.1} parent=1 // pred_fallthru
      _
    // Predicated region
    $region18: #{tpu_custom_call.1} parent=1 // pred_check
      _
    $region19: #{tpu_custom_call.1} parent=1 // pred_check_branch
      %51 = sbr.rel (0) target = $region21
    $region20: #{tpu_custom_call.1} parent=1 // pred_region
      %52 = dma.done [#allocation6], 256
    $region21: #{tpu_custom_call.1} parent=1 // pred_fallthru
      _
    // Predicated region
    $region22: #{tpu_custom_call.1} parent=1 // pred_check
      _
    $region23: #{tpu_custom_call.1} parent=1 // pred_check_branch
      %54 = sbr.rel (0) target = $region25
    $region24: #{tpu_custom_call.1} parent=1 // pred_region
      %55 = dma.done [#allocation6], 1024
    $region25: #{tpu_custom_call.1} parent=1 // pred_fallthru
      _
    %v56 = vld [vmem:[#allocation5] sm:$0xff]
    %v57 = vld [vmem:[#allocation5 + $0x8] sm:$0xff]
    %v58 = vld [vmem:[#allocation7] sm:$0xff]
    %v59 = vld [vmem:[#allocation7 + $0x8] sm:$0xff]
    %v60 = vld [vmem:[#allocation7 + $0x10] sm:$0xff]
    %v61 = vld [vmem:[#allocation7 + $0x18] sm:$0xff]
    %v62 = vld [vmem:[#allocation7 + $0x20] sm:$0xff]
    %v63 = vld [vmem:[#allocation7 + $0x28] sm:$0xff]
    %v64 = vld [vmem:[#allocation7 + $0x30] sm:$0xff]
    %v65 = vld [vmem:[#allocation7 + $0x38] sm:$0xff]
    %vm66 = vcmask 261120
    %v68 = vsel %vm66, %v56, 0
    %70 = vmatprep.subr.mxu0 0.0
    %71 = vmatpush1.msra.mxu0 %v58
    %72 = vmatprep.subr.mxu0 0.0
    %73 = vmatpush1.msra.mxu0 %v59
    %74 = vmatprep.subr.mxu0 0.0
    %75 = vmatpush1.msra.mxu0 %v60
    %76 = vmatprep.subr.mxu0 0.0
    %77 = vmatpush1.msra.mxu0 %v61
    %78 = vmatprep.subr.mxu0 0.0
    %79 = vmatpush1.msra.mxu0 0.0
    %80 = vmatprep.subr.mxu0 0.0
    %81 = vmatpush1.msra.mxu0 0.0
    %82 = vmatprep.subr.mxu0 0.0
    %83 = vmatpush1.msra.mxu0 0.0
    %84 = vmatprep.subr.mxu0 0.0
    %85 = vmatpush1.msra.mxu0 0.0
    %86 = vmatprep.subr.mxu0 0.0
    %87 = vmatpush1.msra.mxu0 0.0
    %88 = vmatprep.subr.mxu0 0.0
    %89 = vmatpush1.msra.mxu0 0.0
    %90 = vmatprep.subr.mxu0 0.0
    %91 = vmatpush1.msra.mxu0 0.0
    %92 = vmatprep.subr.mxu0 0.0
    %93 = vmatpush1.msra.mxu0 0.0
    %94 = vmatprep.subr.mxu0 0.0
    %95 = vmatpush1.msra.mxu0 0.0
    %96 = vmatprep.subr.mxu0 0.0
    %97 = vmatpush1.msra.mxu0 0.0
    %98 = vmatprep.subr.mxu0 0.0
    %99 = vmatpush1.msra.mxu0 0.0
    %100 = vmatprep.subr.mxu0 0.0
    %101 = vmatpush1.msra.mxu0 0.0
    %102 = vmatprep.subr.mxu0 0.0
    %103 = vmatpush1.msra.mxu0 0.0
    %104 = vmatprep.subr.mxu0 0.0
    %105 = vmatpush1.msra.mxu0 0.0
    %106 = vmatprep.subr.mxu0 0.0
    %107 = vmatpush1.msra.mxu0 0.0
    %108 = vmatprep.subr.mxu0 0.0
    %109 = vmatpush1.msra.mxu0 0.0
    %110 = vmatprep.subr.mxu0 0.0
    %111 = vmatpush1.msra.mxu0 0.0
    %112 = vmatprep.subr.mxu0 0.0
    %113 = vmatpush1.msra.mxu0 0.0
    %114 = vmatprep.subr.mxu0 0.0
    %115 = vmatpush1.msra.mxu0 0.0
    %116 = vmatprep.subr.mxu0 0.0
    %117 = vmatpush1.msra.mxu0 0.0
    %118 = vmatprep.subr.mxu0 0.0
    %119 = vmatpush1.msra.mxu0 0.0
    %120 = vmatprep.subr.mxu0 0.0
    %121 = vmatpush1.msra.mxu0 0.0
    %122 = vmatprep.subr.mxu0 0.0
    %123 = vmatpush1.msra.mxu0 0.0
    %124 = vmatprep.subr.mxu0 0.0
    %125 = vmatpush1.msra.mxu0 0.0
    %126 = vmatprep.subr.mxu0 0.0
    %127 = vmatpush1.msra.mxu0 0.0
    %128 = vmatprep.subr.mxu0 0.0
    %129 = vmatpush1.msra.mxu0 0.0
    %130 = vmatprep.subr.mxu0 0.0
    %131 = vmatpush1.msra.mxu0 0.0
    %132 = vmatprep.subr.mxu0 0.0
    %133 = vmatpush1.msra.mxu0 0.0
    %134 = vmatprep.mubr.f32.mxu0 0.0
    %135 = vmatmul.mubr.f32.gmra.mrb[0].mxu0 %v68
    %v136 = vpop.f32.mrb[0].mxu0
    %v137 = vadd.f32 0.0, %v136
    %v138 = vpop.f32.mrb[0].mxu0
    %139 = vdwg.mxu0
    %v141 = vsel %vm66, %v57, 0
    %143 = vmatprep.subr.mxu0 0.0
    %144 = vmatpush1.msra.mxu0 %v62
    %145 = vmatprep.subr.mxu0 0.0
    %146 = vmatpush1.msra.mxu0 %v63
    %147 = vmatprep.subr.mxu0 0.0
    %148 = vmatpush1.msra.mxu0 %v64
    %149 = vmatprep.subr.mxu0 0.0
    %150 = vmatpush1.msra.mxu0 %v65
    %151 = vmatprep.subr.mxu0 0.0
    %152 = vmatpush1.msra.mxu0 0.0
    %153 = vmatprep.subr.mxu0 0.0
    %154 = vmatpush1.msra.mxu0 0.0
    %155 = vmatprep.subr.mxu0 0.0
    %156 = vmatpush1.msra.mxu0 0.0
    %157 = vmatprep.subr.mxu0 0.0
    %158 = vmatpush1.msra.mxu0 0.0
    %159 = vmatprep.subr.mxu0 0.0
    %160 = vmatpush1.msra.mxu0 0.0
    %161 = vmatprep.subr.mxu0 0.0
    %162 = vmatpush1.msra.mxu0 0.0
    %163 = vmatprep.subr.mxu0 0.0
    %164 = vmatpush1.msra.mxu0 0.0
    %165 = vmatprep.subr.mxu0 0.0
    %166 = vmatpush1.msra.mxu0 0.0
    %167 = vmatprep.subr.mxu0 0.0
    %168 = vmatpush1.msra.mxu0 0.0
    %169 = vmatprep.subr.mxu0 0.0
    %170 = vmatpush1.msra.mxu0 0.0
    %171 = vmatprep.subr.mxu0 0.0
    %172 = vmatpush1.msra.mxu0 0.0
    %173 = vmatprep.subr.mxu0 0.0
    %174 = vmatpush1.msra.mxu0 0.0
    %175 = vmatprep.subr.mxu0 0.0
    %176 = vmatpush1.msra.mxu0 0.0
    %177 = vmatprep.subr.mxu0 0.0
    %178 = vmatpush1.msra.mxu0 0.0
    %179 = vmatprep.subr.mxu0 0.0
    %180 = vmatpush1.msra.mxu0 0.0
    %181 = vmatprep.subr.mxu0 0.0
    %182 = vmatpush1.msra.mxu0 0.0
    %183 = vmatprep.subr.mxu0 0.0
    %184 = vmatpush1.msra.mxu0 0.0
    %185 = vmatprep.subr.mxu0 0.0
    %186 = vmatpush1.msra.mxu0 0.0
    %187 = vmatprep.subr.mxu0 0.0
    %188 = vmatpush1.msra.mxu0 0.0
    %189 = vmatprep.subr.mxu0 0.0
    %190 = vmatpush1.msra.mxu0 0.0
    %191 = vmatprep.subr.mxu0 0.0
    %192 = vmatpush1.msra.mxu0 0.0
    %193 = vmatprep.subr.mxu0 0.0
    %194 = vmatpush1.msra.mxu0 0.0
    %195 = vmatprep.subr.mxu0 0.0
    %196 = vmatpush1.msra.mxu0 0.0
    %197 = vmatprep.subr.mxu0 0.0
    %198 = vmatpush1.msra.mxu0 0.0
    %199 = vmatprep.subr.mxu0 0.0
    %200 = vmatpush1.msra.mxu0 0.0
    %201 = vmatprep.subr.mxu0 0.0
    %202 = vmatpush1.msra.mxu0 0.0
    %203 = vmatprep.subr.mxu0 0.0
    %204 = vmatpush1.msra.mxu0 0.0
    %205 = vmatprep.subr.mxu0 0.0
    %206 = vmatpush1.msra.mxu0 0.0
    %207 = vmatprep.mubr.f32.mxu0 0.0
    %208 = vmatmul.mubr.f32.gmra.mrb[0].mxu0 %v141
    %v209 = vpop.f32.mrb[0].mxu0
    %v210 = vadd.f32 0.0, %v209
    %v211 = vpop.f32.mrb[0].mxu0
    %212 = vdwg.mxu0
    %v213 = vld [vmem:[#allocation2] sm:$0xff]
    %v214 = vld [vmem:[#allocation2 + $0x8] sm:$0xff]
    %v215 = vmul.f32 %v137, 2.9
    %v216 = vmul.f32 %v210, 2.9
    %v217 = vmul.f32 %v213, 1.5
    %v218 = vmul.f32 %v214, 1.5
    %v219 = vadd.f32 %v215, %v217
    %v220 = vadd.f32 %v216, %v218
    %221 = vst [vmem:[#allocation8] sm:$0xff] %v219
    %222 = vst [vmem:[#allocation8 + $0x8] sm:$0xff] %v220
    // Predicated region
    $region26: #{tpu_custom_call.1} parent=1 // pred_check
      _
    $region27: #{tpu_custom_call.1} parent=1 // pred_check_branch
      %224 = sbr.rel (0) target = $region29
    $region28: #{tpu_custom_call.1} parent=1 // pred_region
      %s226 = ssub.s32 256, 256
      %227 = vsyncadd [#allocation4], %s226
      %s228 = sshll.u32 [#allocation8], 4
      %s229 = int_to_ptr.vmem [resolvable:$true] %s228
      %234 = dma.vmem_to_hbm [thread:$0]  %s229, 256, %s3, [#allocation4], 128, 128, 8
    $region29: #{tpu_custom_call.1} parent=1 // pred_fallthru
      _
    // Predicated region
    $region30: #{tpu_custom_call.1} parent=1 // pred_check
      _
    $region31: #{tpu_custom_call.1} parent=1 // pred_check_branch
      %236 = sbr.rel (0) target = $region33
    $region32: #{tpu_custom_call.1} parent=1 // pred_region
      %237 = dma.done [#allocation4], 256
    $region33: #{tpu_custom_call.1} parent=1 // pred_fallthru
      _
    %238 = vsyncpa [#allocation3], 1
    %239 = vsyncpa [#allocation6], 1
    %240 = vsyncpa [#allocation4], 1

</llo_original>
